<compile_context>
chip_gen: v7x
topology: tpu7x:2x2x1
jax: 0.10.0
libtpu: 0.0.40
codegen_flags: <defaults>
</compile_context>

<pallas_src>
import jax
import jax.numpy as jnp
from jax import lax
from jax.experimental import pallas as pl
from jax.experimental.pallas import tpu as pltpu

_EPS = 1e-6
_LANE = 128
_SUBLANE = 16                      # bf16-safe sublane multiple (valid for f32 too)
_VMEM_BUDGET = 40 * 1024 * 1024    # conservative: fits v7x 64 MiB physical VMEM
_VMEM_LIMIT_CAP = 48 * 1024 * 1024


def _round_up(x: int, m: int) -> int:
    return ((x + m - 1) // m) * m


def _normalize_rows(acc_f32):
    # 1 / max(sqrt(sumsq), eps) == min(rsqrt(sumsq), 1/eps); rsqrt(0)=inf clamps
    # to 1/eps, matching torch.clamp(norm, min=eps).  rsqrt runs on the EUP
    # slot, the multiply on the VPU (no divide).
    sumsq = jnp.sum(acc_f32 * acc_f32, axis=1, keepdims=True)
    inv = jnp.minimum(lax.rsqrt(sumsq), 1.0 / _EPS)
    return acc_f32 * inv


def _vfe_kernel_fast(f_ref, e_ref, o_ref):
    # Single K block: matmul + normalize + store, no scratch, no pl.when.
    acc = jnp.dot(f_ref[...], e_ref[...], preferred_element_type=jnp.float32)
    o_ref[...] = _normalize_rows(acc).astype(o_ref.dtype)


def _vfe_kernel_ktiled(f_ref, e_ref, o_ref, acc_ref):
    # Grid = (row tiles over N, reduction tiles over K); K axis innermost.
    k = pl.program_id(1)

    @pl.when(k == 0)
    def _():
        acc_ref[...] = jnp.zeros_like(acc_ref)

    acc_ref[...] += jnp.dot(
        f_ref[...], e_ref[...], preferred_element_type=jnp.float32
    )

    @pl.when(k == pl.num_programs(1) - 1)
    def _():
        o_ref[...] = _normalize_rows(acc_ref[...]).astype(o_ref.dtype)


def vertex_feature_embedder(features: jax.Array,
                            embeddings: jax.Array,
                            *,
                            tn: int = 1024,
                            tk: int = 4096,
                            compute_dtype=jnp.bfloat16,
                            out_dtype=None) -> jax.Array:
    """normalize_embeddings(features @ embeddings) as a Pallas TPU kernel."""
    N, K = features.shape
    K2, D = embeddings.shape
    assert K == K2, "feature dim mismatch between features and embeddings"

    out_dtype = features.dtype if out_dtype is None else out_dtype
    out_isz = jnp.dtype(out_dtype).itemsize

    # --- dtype: bf16 inputs halve HBM traffic; accumulation stays f32 --------
    f = features if compute_dtype is None else features.astype(compute_dtype)
    e = embeddings if embeddings.dtype == f.dtype else embeddings.astype(f.dtype)
    isz = jnp.dtype(f.dtype).itemsize

    # --- lane-dense output: pad D to 128 with zero columns (norm unchanged) --
    D_eff = D
    if D < _LANE:
        D_eff = _LANE
        e = jnp.pad(e, ((0, 0), (0, D_eff - D)))

    # --- row tile selection (no padding of N; ragged last tile is fine) ------
    if N < 2 * _SUBLANE:
        tn_eff = N                                   # single full-dim block
    else:
        tn_eff = min(_round_up(tn, _SUBLANE), N)
        if tn_eff < N:
            tn_eff = _round_up(tn_eff, _SUBLANE)
        if pl.cdiv(N, tn_eff) < 2:                   # give both v7x TCs a tile
            tn_eff = _round_up(pl.cdiv(N, 2), _SUBLANE)

    Kr = _round_up(K, _LANE)

    def fast_vmem(t):
        # double-buffered feature tile + resident embedding slab (+dbuf margin)
        # + double-buffered output tile + f32 matmul result.
        return (isz * (2 * t * Kr + 2 * Kr * D_eff)
                + out_isz * 2 * t * D_eff + 4 * t * D_eff)

    while tn_eff > _SUBLANE and fast_vmem(tn_eff) > _VMEM_BUDGET:
        tn_eff = max(_SUBLANE, _round_up(tn_eff // 2, _SUBLANE))

    use_fast = (K <= tk) and fast_vmem(tn_eff) <= _VMEM_BUDGET

    if use_fast:
        # K zero-padding only when K is not lane-aligned (needed so the
        # reduction lanes are well-defined; padding rows of N is never needed).
        if Kr != K:
            f = jnp.pad(f, ((0, 0), (0, Kr - K)))
            e = jnp.pad(e, ((0, Kr - K), (0, 0)))
        K_p = Kr if Kr != K else K

        grid = (pl.cdiv(N, tn_eff),)
        need = fast_vmem(tn_eff)
        vmem_limit = int(min(max(need * 2, 4 << 20), _VMEM_LIMIT_CAP))

        out = pl.pallas_call(
            _vfe_kernel_fast,
            out_shape=jax.ShapeDtypeStruct((N, D_eff), out_dtype),
            grid_spec=pltpu.PrefetchScalarGridSpec(
                num_scalar_prefetch=0,
                grid=grid,
                in_specs=[
                    # row tile of features
                    pl.BlockSpec((tn_eff, K_p), lambda i: (i, 0)),
                    # constant index -> [K, D] slab DMA'd once, stays resident
                    pl.BlockSpec((K_p, D_eff), lambda i: (0, 0)),
                ],
                out_specs=pl.BlockSpec((tn_eff, D_eff), lambda i: (i, 0)),
            ),
            compiler_params=pltpu.CompilerParams(
                dimension_semantics=("parallel",),
                vmem_limit_bytes=vmem_limit,
            ),
            cost_estimate=pl.CostEstimate(
                flops=2 * N * K_p * D_eff,
                bytes_accessed=isz * (N * K_p + K_p * D_eff) + out_isz * N * D_eff,
                transcendentals=N,
            ),
        )(f, e)
    else:
        # K-tiled reduction fallback for very large K (and/or large K*D).
        tk_eff = _round_up(min(tk, Kr), _LANE)

        def tiled_vmem(t_n, t_k):
            return (isz * (2 * t_n * t_k + 2 * t_k * D_eff)
                    + out_isz * 2 * t_n * D_eff + 4 * t_n * D_eff)

        while (tiled_vmem(tn_eff, tk_eff) > _VMEM_BUDGET
               and (tn_eff > _SUBLANE or tk_eff > _LANE)):
            if tn_eff > _SUBLANE:
                tn_eff = max(_SUBLANE, _round_up(tn_eff // 2, _SUBLANE))
            else:
                tk_eff = max(_LANE, _round_up(tk_eff // 2, _LANE))

        k_pad = _round_up(K, tk_eff)
        if k_pad != K:
            # zero padding along K is required for reduction correctness
            f = jnp.pad(f, ((0, 0), (0, k_pad - K)))
            e = jnp.pad(e, ((0, k_pad - K), (0, 0)))

        num_row_tiles = pl.cdiv(N, tn_eff)
        grid = (num_row_tiles, k_pad // tk_eff)
        need = tiled_vmem(tn_eff, tk_eff)
        vmem_limit = int(min(max(need * 2, 4 << 20), _VMEM_LIMIT_CAP))

        # TODO(synk): for huge K keep the [K, D] slab resident via
        # memory_space=pl.ANY + one-time manual copy (avoids re-streaming it
        # per row tile), and add a D grid axis for very large D on v7x.
        out = pl.pallas_call(
            _vfe_kernel_ktiled,
            out_shape=jax.ShapeDtypeStruct((N, D_eff), out_dtype),
            grid_spec=pltpu.PrefetchScalarGridSpec(
                num_scalar_prefetch=0,
                grid=grid,
                in_specs=[
                    pl.BlockSpec((tn_eff, tk_eff), lambda i, k: (i, k)),
                    pl.BlockSpec((tk_eff, D_eff), lambda i, k: (k, 0)),
                ],
                out_specs=pl.BlockSpec((tn_eff, D_eff), lambda i, k: (i, 0)),
                scratch_shapes=[pltpu.VMEM((tn_eff, D_eff), jnp.float32)],
            ),
            compiler_params=pltpu.CompilerParams(
                dimension_semantics=("parallel", "arbitrary"),
                vmem_limit_bytes=vmem_limit,
            ),
            cost_estimate=pl.CostEstimate(
                flops=2 * N * k_pad * D_eff,
                # embeddings are re-streamed once per row tile in this path
                bytes_accessed=(isz * (N * k_pad + num_row_tiles * k_pad * D_eff)
                                + out_isz * N * D_eff),
                transcendentals=N,
            ),
        )(f, e)

    if D_eff != D:
        out = out[:, :D]
    return out


if __name__ == "__main__":
    # Module sizes: num_vertices=N, feature_dim=K, embed_dim=D (kept small).
    N, K, D = 256, 128, 128

    key = jax.random.PRNGKey(0)
    kf, ke = jax.random.split(key)
    # `features` is a buffer (never zeroed in __init__); init deterministically.
    features = jax.random.normal(kf, (N, K), dtype=jnp.float32)
    # NOTE: reset_parameters() zeroes `embeddings`; deterministic random values
    # are used so the kernel exercises a non-degenerate normalization path.
    embeddings = jax.random.normal(ke, (K, D), dtype=jnp.float32)

    def ref_fn(f, e):
        x = f @ e
        return x / jnp.maximum(jnp.linalg.norm(x, axis=1, keepdims=True), _EPS)

    # 1) exact f32 path (fast path, grid split across 2 row tiles).
    out_f32 = jax.block_until_ready(
        vertex_feature_embedder(features, embeddings, compute_dtype=jnp.float32))
    assert out_f32.shape == (N, D)
    assert jnp.allclose(out_f32, ref_fn(features, embeddings), atol=1e-5, rtol=1e-5)

    # 2) default bf16-input path (HBM-bandwidth optimized, f32 accumulation/output).
    out_bf = jax.block_until_ready(vertex_feature_embedder(features, embeddings))
    assert out_bf.shape == (N, D) and out_bf.dtype == jnp.float32
    assert jnp.allclose(out_bf, ref_fn(features, embeddings), atol=2e-2, rtol=2e-2)

    # 3) ragged N, non-lane-aligned K, small D (exercises ragged last row tile,
    #    K lane-padding and the lane-dense D<128 output path).
    N2, K2, D2 = 200, 96, 16
    f2 = jax.random.normal(kf, (N2, K2), dtype=jnp.float32)
    e2 = jax.random.normal(ke, (K2, D2), dtype=jnp.float32)
    out2 = jax.block_until_ready(
        vertex_feature_embedder(f2, e2, compute_dtype=jnp.float32))
    assert out2.shape == (N2, D2)
    assert jnp.allclose(out2, ref_fn(f2, e2), atol=1e-5, rtol=1e-5)

    # 4) force the K-tiled accumulator fallback (tk smaller than K).
    N3, K3, D3 = 200, 256, 128
    f3 = jax.random.normal(kf, (N3, K3), dtype=jnp.float32)
    e3 = jax.random.normal(ke, (K3, D3), dtype=jnp.float32)
    out3 = jax.block_until_ready(
        vertex_feature_embedder(f3, e3, compute_dtype=jnp.float32, tk=128))
    assert out3.shape == (N3, D3)
    assert jnp.allclose(out3, ref_fn(f3, e3), atol=1e-5, rtol=1e-5)

    print("KERNEL_OK")
</pallas_src>

<mosaic_0001>
module attributes {stable_mosaic.version = 11 : i64} {
  func.func @_vfe_kernel_fast(%arg0: i32, %arg1: memref<128x128xf32, #tpu.memory_space<vmem>>, %arg2: memref<128x128xf32, #tpu.memory_space<vmem>>, %arg3: memref<128x128xf32, #tpu.memory_space<vmem>>) attributes {dimension_semantics = [#tpu.dimension_semantics<parallel>], iteration_bounds = array<i64: 2>, scalar_prefetch = 0 : i64, scratch_operands = 0 : i64, tpu.core_type = #tpu.core_type<tc>, window_params = [{transform_indices = @transform_0, window_bounds = array<i64: 128, 128>}, {pipeline_mode = #tpu.pipeline_mode<synchronous>, transform_indices = @transform_1, window_bounds = array<i64: 128, 128>}, {transform_indices = @transform_2, window_bounds = array<i64: 128, 128>}]} {
    %c0 = arith.constant 0 : index
    %c0_0 = arith.constant 0 : index
    %0 = vector.load %arg1[%c0, %c0_0] : memref<128x128xf32, #tpu.memory_space<vmem>>, vector<128x128xf32>
    %c0_1 = arith.constant 0 : index
    %c0_2 = arith.constant 0 : index
    %1 = vector.load %arg2[%c0_1, %c0_2] : memref<128x128xf32, #tpu.memory_space<vmem>>, vector<128x128xf32>
    %cst = arith.constant dense<0.000000e+00> : vector<128x128xf32>
    %2 = tpu.matmul %0, %1, %cst {dimension_numbers = #tpu.dot_dimension_numbers<[1], [0], [0], [1], [0, 0, 1, 1], [], []>} : vector<128x128xf32>, vector<128x128xf32>, vector<128x128xf32> -> vector<128x128xf32>
    %3 = arith.mulf %2, %2 : vector<128x128xf32>
    %cst_3 = arith.constant dense<0.000000e+00> : vector<128xf32>
    %4 = vector.multi_reduction <add>, %3, %cst_3 [1] : vector<128x128xf32> to vector<128xf32>
    %5 = vector.shape_cast %4 : vector<128xf32> to vector<128x1xf32>
    %6 = math.rsqrt %5 : vector<128x1xf32>
    %cst_4 = arith.constant 1.000000e+06 : f32
    %7 = vector.broadcast %cst_4 : f32 to vector<128x1xf32>
    %8 = arith.minimumf %6, %7 : vector<128x1xf32>
    %9 = vector.broadcast %8 : vector<128x1xf32> to vector<128x128xf32>
    %10 = arith.mulf %2, %9 : vector<128x128xf32>
    %c0_5 = arith.constant 0 : index
    %c0_6 = arith.constant 0 : index
    %11 = vector.load %arg3[%c0_5, %c0_6] : memref<128x128xf32, #tpu.memory_space<vmem>>, vector<128x128xf32>
    tpu.vector_store %arg3[%c0_5, %c0_6], %10 {strides = array<i32>} : memref<128x128xf32, #tpu.memory_space<vmem>>, vector<128x128xf32>,
    return
  }
  func.func @transform_0(%arg0: i32) -> (i32, i32) {
    %c0_i32 = arith.constant 0 : i32
    %c0_i32_0 = arith.constant 0 : i32
    return %arg0, %c0_i32 : i32, i32
  }
  func.func @transform_1(%arg0: i32) -> (i32, i32) {
    %c0_i32 = arith.constant 0 : i32
    %c0_i32_0 = arith.constant 0 : i32
    %c0_i32_1 = arith.constant 0 : i32
    return %c0_i32, %c0_i32_0 : i32, i32
  }
  func.func @transform_2(%arg0: i32) -> (i32, i32) {
    %c0_i32 = arith.constant 0 : i32
    %c0_i32_0 = arith.constant 0 : i32
    return %arg0, %c0_i32 : i32, i32
  }
}

</mosaic_0001>

<llo_original>
// kernel: tpu_custom_call.1
$region0: #{tpu_custom_call.1}
  #allocation0 [shape = 'u32[]', space=smem, size = 0x4, offset = 0x4, fixed_abs, tag = 'smem constant byte address 0x4 - core index']
  #allocation1 [shape = 'u32[144,128]{1,0:T(1,128)}', space=vmem, size = 0x12000, scoped, tag = 'internal scratch']
  %s0 = inlined_call_operand.hbm [shape: f32[256,128], index: 0, kind: input, shape index: {}]
  %s1 = inlined_call_operand.hbm [shape: f32[128,128], index: 1, kind: input, shape index: {}]
  %s2 = inlined_call_operand.hbm [shape: f32[256,128], index: 2, kind: output, shape index: {}]
  %s3 = sld [smem:[#allocation0]]
  $region49: #{tpu_custom_call.1} parent=0
    _
  %s5 = ssub.s32 1, %s3
  %s6 = scalar_select 0, %s5, %s3
  $region1: #{tpu_custom_call.1} parent=0
    #allocation2 [shape = 'u8[131072]{0}', space=vmem, size = 0x20000, scoped, tag = 'input window, operand 0']
    #allocation3 [shape = 's32[2]{0}', space=sflag, size = 0x8, scoped, tag = 'scoped memory for tpu_custom_call.1']
    #allocation4 [shape = 's32[2]{0}', space=sflag, size = 0x8, scoped, tag = 'scoped memory for tpu_custom_call.1']
    #allocation5 [shape = 'u8[65536]{0}', space=vmem, size = 0x10000, scoped, tag = 'input window, operand 1, single buffered']
    #allocation6 [shape = 's32[1]{0}', space=sflag, size = 0x4, scoped, tag = 'scoped memory for tpu_custom_call.1']
    #allocation7 [shape = 'u8[131072]{0}', space=vmem, size = 0x20000, scoped, tag = 'output window, operand 0']
    %7 = vsyncpa [#allocation3], 0
    %s8 = scalar_lea.sflag [#allocation3], 1
    %9 = vsyncpa %s8, 0
    %10 = vsyncpa [#allocation6], 0
    %11 = vsyncpa [#allocation4], 0
    %s12 = scalar_lea.sflag [#allocation4], 1
    %13 = vsyncpa %s12, 0
    loop: start=0, step=1, limit=4
    $region2: #{tpu_custom_call.1} parent=1 // loop_pre_header
      _
    $region3: #{tpu_custom_call.1} parent=1 // loop_header
      %s15 = sphi 0, %s19
      %p16 = scmp.ge.s32.totalorder %s15, 4
      %s25 = sphi 0, %s27
      %s28 = sphi 0, %s25
      %s29 = sphi 0, %s28
      %s45 = sphi 0, %s29
      %s49 = sphi 0, %s49
      %s51 = sphi 0, %s49
      %s52 = sphi 0, %s51
      %s66 = sphi 0, %s52
      %s72 = sphi 0, %s74
      %s75 = sphi 0, %s72
      %s76 = sphi 0, %s75
      %s92 = sphi 0, %s76
    $region4: #{tpu_custom_call.1} parent=1 // loop_header_branch
      %18 = sbr.rel (%p16) target = $region8
    $region5: #{tpu_custom_call.1} parent=1 // loop_body
      %s20 = ssub.s32 %s15, 1
      %s21 = ssub.s32 %s15, 2
      %s22 = sadd.s32 %s15, 1
      %s23 = ssub.s32 %s15, %s22
      %p24 = scmp.eq.s32.totalorder %s23, 0
      %s26 = sadd.s32 %s25, 1
      %s27 = scalar_select %p24, %s25, %s26
      %p30 = pneg %p24
      %p31 = scmp.eq.s32.totalorder %s15, 1
      %p32 = por %p30, %p31
      %p33 = scmp.ne.s32.totalorder %s25, %s28
      %p34 = scmp.eq.s32.totalorder %s15, 0
      %p35 = por %p33, %p34
      %p36 = scmp.ne.s32.totalorder %s25, %s28
      %p37 = scmp.eq.s32.totalorder %s20, 1
      %p38 = por %p36, %p37
      %p39 = scmp.ne.s32.totalorder %s28, %s29
      %p40 = scmp.eq.s32.totalorder %s20, 0
      %p41 = por %p39, %p40
      %p42 = scmp.ne.s32.totalorder %s28, %s29
      %p43 = scmp.eq.s32.totalorder %s21, 1
      %p44 = por %p42, %p43
      %p46 = scmp.ne.s32.totalorder %s29, %s45
      %p47 = scmp.eq.s32.totalorder %s21, 0
      %p48 = por %p46, %p47
      %s50 = sadd.s32 %s49, 1
      %p53 = scmp.eq.s32.totalorder %s15, 1
      %p54 = scmp.ne.s32.totalorder %s49, %s51
      %p55 = scmp.eq.s32.totalorder %s15, 0
      %p56 = por %p54, %p55
      %p57 = scmp.ne.s32.totalorder %s49, %s51
      %p58 = scmp.eq.s32.totalorder %s20, 1
      %p59 = por %p57, %p58
      %p60 = scmp.ne.s32.totalorder %s51, %s52
      %p61 = scmp.eq.s32.totalorder %s20, 0
      %p62 = por %p60, %p61
      %p63 = scmp.ne.s32.totalorder %s51, %s52
      %p64 = scmp.eq.s32.totalorder %s21, 1
      %p65 = por %p63, %p64
      %p67 = scmp.ne.s32.totalorder %s52, %s66
      %p68 = scmp.eq.s32.totalorder %s21, 0
      %p69 = por %p67, %p68
      %s70 = ssub.s32 %s15, %s22
      %p71 = scmp.eq.s32.totalorder %s70, 0
      %s73 = sadd.s32 %s72, 1
      %s74 = scalar_select %p71, %s72, %s73
      %p77 = pneg %p71
      %p78 = scmp.eq.s32.totalorder %s15, 1
      %p79 = por %p77, %p78
      %p80 = scmp.ne.s32.totalorder %s72, %s75
      %p81 = scmp.eq.s32.totalorder %s15, 0
      %p82 = por %p80, %p81
      %p83 = scmp.ne.s32.totalorder %s72, %s75
      %p84 = scmp.eq.s32.totalorder %s20, 1
      %p85 = por %p83, %p84
      %p86 = scmp.ne.s32.totalorder %s75, %s76
      %p87 = scmp.eq.s32.totalorder %s20, 0
      %p88 = por %p86, %p87
      %p89 = scmp.ne.s32.totalorder %s75, %s76
      %p90 = scmp.eq.s32.totalorder %s21, 1
      %p91 = por %p89, %p90
      %p93 = scmp.ne.s32.totalorder %s76, %s92
      %p94 = scmp.eq.s32.totalorder %s21, 0
      %p95 = por %p93, %p94
      %p96 = scmp.le.s32.totalorder 1, %s15
      %p97 = scmp.lt.s32.totalorder %s15, 3
      %p98 = pnand %p96, %p97
      %p99 = pneg %p98
      // Predicated region
      $region9: #{tpu_custom_call.1} parent=5 // pred_check
        _
      $region10: #{tpu_custom_call.1} parent=5 // pred_check_branch
        %101 = sbr.rel (%p98) target = $region12
      $region11: #{tpu_custom_call.1} parent=5 // pred_region
        %s102 = ssub.s32 %s15, 1
        // Predicated region
        $region13: #{tpu_custom_call.1} parent=11 // pred_check
          %p103 = pneg %p62
        $region14: #{tpu_custom_call.1} parent=11 // pred_check_branch
          %105 = sbr.rel (%p103) target = $region16
        $region15: #{tpu_custom_call.1} parent=11 // pred_region
          %s107 = ssub.s32 2048, 2048
          %108 = vsyncadd [#allocation6], %s107
          %s109 = sshll.u32 [#allocation5], 4
          %s110 = int_to_ptr.vmem [resolvable:$true] %s109
          %115 = dma.hbm_to_vmem [thread:$0]  %s1, 2048, %s110, [#allocation6], 128, 128, 8
        $region16: #{tpu_custom_call.1} parent=11 // pred_fallthru
          _
      $region12: #{tpu_custom_call.1} parent=5 // pred_fallthru
        _
      %p116 = scmp.lt.s32.totalorder %s15, 2
      // Predicated region
      $region17: #{tpu_custom_call.1} parent=5 // pred_check
        %p117 = pneg %p116
      $region18: #{tpu_custom_call.1} parent=5 // pred_check_branch
        %119 = sbr.rel (%p117) target = $region20
      $region19: #{tpu_custom_call.1} parent=5 // pred_region
        // Predicated region
        $region21: #{tpu_custom_call.1} parent=19 // pred_check
          %p120 = pneg %p35
        $region22: #{tpu_custom_call.1} parent=19 // pred_check_branch
          %122 = sbr.rel (%p120) target = $region24
        $region23: #{tpu_custom_call.1} parent=19 // pred_region
          %s123 = sand.u32 %s25, 1
          %s124 = scalar_lea.sflag [#allocation3], %s123
          %s125 = sand.u32 %s25, 1
          %s126 = smul.addr %s125, 128
          %s127 = scalar_lea.vmem [#allocation2], %s126
          %s128 = smul.u32 16, %s15
          %s130 = ssub.s32 2048, 2048
          %131 = vsyncadd %s124, %s130
          %s132 = smul.addr %s128, 128
          %s133 = scalar_lea.hbm %s0, %s132
          %s134 = sshll.u32 %s127, 4
          %s135 = int_to_ptr.vmem [resolvable:$true] %s134
          %140 = dma.hbm_to_vmem [thread:$0]  %s133, 2048, %s135, %s124, 128, 128, 8
        $region24: #{tpu_custom_call.1} parent=19 // pred_fallthru
          _
      $region20: #{tpu_custom_call.1} parent=5 // pred_fallthru
        _
      %p141 = scmp.le.s32.totalorder 1, %s15
      %p142 = scmp.lt.s32.totalorder %s15, 3
      %p143 = pnand %p141, %p142
      %p144 = pneg %p143
      // Predicated region
      $region25: #{tpu_custom_call.1} parent=5 // pred_check
        _
      $region26: #{tpu_custom_call.1} parent=5 // pred_check_branch
        %146 = sbr.rel (%p143) target = $region28
      $region27: #{tpu_custom_call.1} parent=5 // pred_region
        %s147 = ssub.s32 %s15, 1
        %s148 = sand.u32 %s28, 1
        %s149 = scalar_lea.sflag [#allocation3], %s148
        %s150 = sand.u32 %s28, 1
        %s151 = smul.addr %s150, 128
        %s152 = scalar_lea.vmem [#allocation2], %s151
        // Predicated region
        $region29: #{tpu_custom_call.1} parent=27 // pred_check
          %p153 = pneg %p41
        $region30: #{tpu_custom_call.1} parent=27 // pred_check_branch
          %155 = sbr.rel (%p153) target = $region32
        $region31: #{tpu_custom_call.1} parent=27 // pred_region
          %156 = dma.done %s149, 2048
        $region32: #{tpu_custom_call.1} parent=27 // pred_fallthru
          _
        // Predicated region
        $region33: #{tpu_custom_call.1} parent=27 // pred_check
          %p157 = pneg %p62
        $region34: #{tpu_custom_call.1} parent=27 // pred_check_branch
          %159 = sbr.rel (%p157) target = $region36
        $region35: #{tpu_custom_call.1} parent=27 // pred_region
          %160 = dma.done [#allocation6], 2048
        $region36: #{tpu_custom_call.1} parent=27 // pred_fallthru
          _
        %s161 = sand.u32 %s28, 1
        %s162 = scalar_lea.sflag [#allocation3], %s161
        %s163 = sand.u32 %s28, 1
        %s164 = smul.addr %s163, 128
        %s165 = scalar_lea.vmem [#allocation2], %s164
        %p166 = pneg %p41
        %p167 = pneg %p38
        %p168 = pneg %p62
        %p169 = pneg %p59
        %p170 = pneg %p88
        %p171 = pneg %p85
        %s172 = sand.u32 %s75, 1
        %s173 = scalar_lea.sflag [#allocation4], %s172
        %s174 = sand.u32 %s75, 1
        %s175 = smul.addr %s174, 128
        %s176 = scalar_lea.vmem [#allocation7], %s175
        %s177 = smul.u32 16, %s20
        %s178 = smul.u32 16, %s20
        %v179 = vld [vmem:[%s152] sm:$0xff]
        %v180 = vld [vmem:[%s152 + $0x8] sm:$0xff]
        %v181 = vld [vmem:[%s152 + $0x10] sm:$0xff]
        %v182 = vld [vmem:[%s152 + $0x18] sm:$0xff]
        %v183 = vld [vmem:[%s152 + $0x20] sm:$0xff]
        %v184 = vld [vmem:[%s152 + $0x28] sm:$0xff]
        %v185 = vld [vmem:[%s152 + $0x30] sm:$0xff]
        %v186 = vld [vmem:[%s152 + $0x38] sm:$0xff]
        %v187 = vld [vmem:[%s152 + $0x40] sm:$0xff]
        %v188 = vld [vmem:[%s152 + $0x48] sm:$0xff]
        %v189 = vld [vmem:[%s152 + $0x50] sm:$0xff]
        %v190 = vld [vmem:[%s152 + $0x58] sm:$0xff]
        %v191 = vld [vmem:[%s152 + $0x60] sm:$0xff]
        %v192 = vld [vmem:[%s152 + $0x68] sm:$0xff]
        %v193 = vld [vmem:[%s152 + $0x70] sm:$0xff]
        %v194 = vld [vmem:[%s152 + $0x78] sm:$0xff]
        %v195 = vld [vmem:[#allocation5] sm:$0xff]
        %v196 = vld [vmem:[#allocation5 + $0x8] sm:$0xff]
        %v197 = vld [vmem:[#allocation5 + $0x10] sm:$0xff]
        %v198 = vld [vmem:[#allocation5 + $0x18] sm:$0xff]
        %v199 = vld [vmem:[#allocation5 + $0x20] sm:$0xff]
        %v200 = vld [vmem:[#allocation5 + $0x28] sm:$0xff]
        %v201 = vld [vmem:[#allocation5 + $0x30] sm:$0xff]
        %v202 = vld [vmem:[#allocation5 + $0x38] sm:$0xff]
        %v203 = vld [vmem:[#allocation5 + $0x40] sm:$0xff]
        %v204 = vld [vmem:[#allocation5 + $0x48] sm:$0xff]
        %v205 = vld [vmem:[#allocation5 + $0x50] sm:$0xff]
        %v206 = vld [vmem:[#allocation5 + $0x58] sm:$0xff]
        %v207 = vld [vmem:[#allocation5 + $0x60] sm:$0xff]
        %v208 = vld [vmem:[#allocation5 + $0x68] sm:$0xff]
        %v209 = vld [vmem:[#allocation5 + $0x70] sm:$0xff]
        %v210 = vld [vmem:[#allocation5 + $0x78] sm:$0xff]
        %211 = vmatprep.subr.mxu0 0.0
        %212 = vmatpush1.msra.mxu0 %v195
        %213 = vmatprep.subr.mxu0 0.0
        %214 = vmatpush1.msra.mxu0 %v196
        %215 = vmatprep.subr.mxu0 0.0
        %216 = vmatpush1.msra.mxu0 %v197
        %217 = vmatprep.subr.mxu0 0.0
        %218 = vmatpush1.msra.mxu0 %v198
        %219 = vmatprep.subr.mxu0 0.0
        %220 = vmatpush1.msra.mxu0 %v199
        %221 = vmatprep.subr.mxu0 0.0
        %222 = vmatpush1.msra.mxu0 %v200
        %223 = vmatprep.subr.mxu0 0.0
        %224 = vmatpush1.msra.mxu0 %v201
        %225 = vmatprep.subr.mxu0 0.0
        %226 = vmatpush1.msra.mxu0 %v202
        %227 = vmatprep.subr.mxu0 0.0
        %228 = vmatpush1.msra.mxu0 %v203
        %229 = vmatprep.subr.mxu0 0.0
        %230 = vmatpush1.msra.mxu0 %v204
        %231 = vmatprep.subr.mxu0 0.0
        %232 = vmatpush1.msra.mxu0 %v205
        %233 = vmatprep.subr.mxu0 0.0
        %234 = vmatpush1.msra.mxu0 %v206
        %235 = vmatprep.subr.mxu0 0.0
        %236 = vmatpush1.msra.mxu0 %v207
        %237 = vmatprep.subr.mxu0 0.0
        %238 = vmatpush1.msra.mxu0 %v208
        %239 = vmatprep.subr.mxu0 0.0
        %240 = vmatpush1.msra.mxu0 %v209
        %241 = vmatprep.subr.mxu0 0.0
        %242 = vmatpush1.msra.mxu0 %v210
        %243 = vmatprep.subr.mxu0 0.0
        %244 = vmatpush1.msra.mxu0 0.0
        %245 = vmatprep.subr.mxu0 0.0
        %246 = vmatpush1.msra.mxu0 0.0
        %247 = vmatprep.subr.mxu0 0.0
        %248 = vmatpush1.msra.mxu0 0.0
        %249 = vmatprep.subr.mxu0 0.0
        %250 = vmatpush1.msra.mxu0 0.0
        %251 = vmatprep.subr.mxu0 0.0
        %252 = vmatpush1.msra.mxu0 0.0
        %253 = vmatprep.subr.mxu0 0.0
        %254 = vmatpush1.msra.mxu0 0.0
        %255 = vmatprep.subr.mxu0 0.0
        %256 = vmatpush1.msra.mxu0 0.0
        %257 = vmatprep.subr.mxu0 0.0
        %258 = vmatpush1.msra.mxu0 0.0
        %259 = vmatprep.subr.mxu0 0.0
        %260 = vmatpush1.msra.mxu0 0.0
        %261 = vmatprep.subr.mxu0 0.0
        %262 = vmatpush1.msra.mxu0 0.0
        %263 = vmatprep.subr.mxu0 0.0
        %264 = vmatpush1.msra.mxu0 0.0
        %265 = vmatprep.subr.mxu0 0.0
        %266 = vmatpush1.msra.mxu0 0.0
        %267 = vmatprep.subr.mxu0 0.0
        %268 = vmatpush1.msra.mxu0 0.0
        %269 = vmatprep.subr.mxu0 0.0
        %270 = vmatpush1.msra.mxu0 0.0
        %271 = vmatprep.subr.mxu0 0.0
        %272 = vmatpush1.msra.mxu0 0.0
        %273 = vmatprep.subr.mxu0 0.0
        %274 = vmatpush1.msra.mxu0 0.0
        %275 = vmatprep.mubr.f32.mxu0 0.0
        %276 = vmatmul.mubr.f32.gmra.mrb[0].mxu0 %v179
        %v277 = vpop.f32.mrb[0].mxu0
        %v278 = vadd.f32 0.0, %v277
        %v279 = vpop.f32.mrb[0].mxu0
        %280 = vmatprep.mubr.f32.mxu0 0.0
        %281 = vmatmul.mubr.f32.gmra.mrb[0].mxu0 %v180
        %v282 = vpop.f32.mrb[0].mxu0
        %v283 = vadd.f32 0.0, %v282
        %v284 = vpop.f32.mrb[0].mxu0
        %285 = vmatprep.mubr.f32.mxu0 0.0
        %286 = vmatmul.mubr.f32.gmra.mrb[0].mxu0 %v181
        %v287 = vpop.f32.mrb[0].mxu0
        %v288 = vadd.f32 0.0, %v287
        %v289 = vpop.f32.mrb[0].mxu0
        %290 = vmatprep.mubr.f32.mxu0 0.0
        %291 = vmatmul.mubr.f32.gmra.mrb[0].mxu0 %v182
        %v292 = vpop.f32.mrb[0].mxu0
        %v293 = vadd.f32 0.0, %v292
        %v294 = vpop.f32.mrb[0].mxu0
        %295 = vmatprep.mubr.f32.mxu0 0.0
        %296 = vmatmul.mubr.f32.gmra.mrb[0].mxu0 %v183
        %v297 = vpop.f32.mrb[0].mxu0
        %v298 = vadd.f32 0.0, %v297
        %v299 = vpop.f32.mrb[0].mxu0
        %300 = vmatprep.mubr.f32.mxu0 0.0
        %301 = vmatmul.mubr.f32.gmra.mrb[0].mxu0 %v184
        %v302 = vpop.f32.mrb[0].mxu0
        %v303 = vadd.f32 0.0, %v302
        %v304 = vpop.f32.mrb[0].mxu0
        %305 = vmatprep.mubr.f32.mxu0 0.0
        %306 = vmatmul.mubr.f32.gmra.mrb[0].mxu0 %v185
        %v307 = vpop.f32.mrb[0].mxu0
        %v308 = vadd.f32 0.0, %v307
        %v309 = vpop.f32.mrb[0].mxu0
        %310 = vmatprep.mubr.f32.mxu0 0.0
        %311 = vmatmul.mubr.f32.gmra.mrb[0].mxu0 %v186
        %v312 = vpop.f32.mrb[0].mxu0
        %v313 = vadd.f32 0.0, %v312
        %v314 = vpop.f32.mrb[0].mxu0
        %315 = vmatprep.mubr.f32.mxu0 0.0
        %316 = vmatmul.mubr.f32.gmra.mrb[0].mxu0 %v187
        %v317 = vpop.f32.mrb[0].mxu0
        %v318 = vadd.f32 0.0, %v317
        %v319 = vpop.f32.mrb[0].mxu0
        %320 = vmatprep.mubr.f32.mxu0 0.0
        %321 = vmatmul.mubr.f32.gmra.mrb[0].mxu0 %v188
        %v322 = vpop.f32.mrb[0].mxu0
        %v323 = vadd.f32 0.0, %v322
        %v324 = vpop.f32.mrb[0].mxu0
        %325 = vmatprep.mubr.f32.mxu0 0.0
        %326 = vmatmul.mubr.f32.gmra.mrb[0].mxu0 %v189
        %v327 = vpop.f32.mrb[0].mxu0
        %v328 = vadd.f32 0.0, %v327
        %v329 = vpop.f32.mrb[0].mxu0
        %330 = vmatprep.mubr.f32.mxu0 0.0
        %331 = vmatmul.mubr.f32.gmra.mrb[0].mxu0 %v190
        %v332 = vpop.f32.mrb[0].mxu0
        %v333 = vadd.f32 0.0, %v332
        %v334 = vpop.f32.mrb[0].mxu0
        %335 = vmatprep.mubr.f32.mxu0 0.0
        %336 = vmatmul.mubr.f32.gmra.mrb[0].mxu0 %v191
        %v337 = vpop.f32.mrb[0].mxu0
        %v338 = vadd.f32 0.0, %v337
        %v339 = vpop.f32.mrb[0].mxu0
        %340 = vmatprep.mubr.f32.mxu0 0.0
        %341 = vmatmul.mubr.f32.gmra.mrb[0].mxu0 %v192
        %v342 = vpop.f32.mrb[0].mxu0
        %v343 = vadd.f32 0.0, %v342
        %v344 = vpop.f32.mrb[0].mxu0
        %345 = vmatprep.mubr.f32.mxu0 0.0
        %346 = vmatmul.mubr.f32.gmra.mrb[0].mxu0 %v193
        %v347 = vpop.f32.mrb[0].mxu0
        %v348 = vadd.f32 0.0, %v347
        %v349 = vpop.f32.mrb[0].mxu0
        %350 = vmatprep.mubr.f32.mxu0 0.0
        %351 = vmatmul.mubr.f32.gmra.mrb[0].mxu0 %v194
        %v352 = vpop.f32.mrb[0].mxu0
        %v353 = vadd.f32 0.0, %v352
        %v354 = vpop.f32.mrb[0].mxu0
        %355 = vdwg.mxu0
        %v356 = vmul.f32 %v278, %v278
        %v357 = vmul.f32 %v283, %v283
        %v358 = vmul.f32 %v288, %v288
        %v359 = vmul.f32 %v293, %v293
        %v360 = vmul.f32 %v298, %v298
        %v361 = vmul.f32 %v303, %v303
        %v362 = vmul.f32 %v308, %v308
        %v363 = vmul.f32 %v313, %v313
        %v364 = vmul.f32 %v318, %v318
        %v365 = vmul.f32 %v323, %v323
        %v366 = vmul.f32 %v328, %v328
        %v367 = vmul.f32 %v333, %v333
        %v368 = vmul.f32 %v338, %v338
        %v369 = vmul.f32 %v343, %v343
        %v370 = vmul.f32 %v348, %v348
        %v371 = vmul.f32 %v353, %v353
        %372 = vadd.xlane.f32.xlu0 %v356
        %v373 = vpop.xlane.xlu0 %372
        %374 = vadd.xlane.f32.xlu0 %v357
        %v375 = vpop.xlane.xlu0 %374
        %376 = vadd.xlane.f32.xlu0 %v358
        %v377 = vpop.xlane.xlu0 %376
        %378 = vadd.xlane.f32.xlu0 %v359
        %v379 = vpop.xlane.xlu0 %378
        %380 = vadd.xlane.f32.xlu0 %v360
        %v381 = vpop.xlane.xlu0 %380
        %382 = vadd.xlane.f32.xlu0 %v361
        %v383 = vpop.xlane.xlu0 %382
        %384 = vadd.xlane.f32.xlu0 %v362
        %v385 = vpop.xlane.xlu0 %384
        %386 = vadd.xlane.f32.xlu0 %v363
        %v387 = vpop.xlane.xlu0 %386
        %388 = vadd.xlane.f32.xlu0 %v364
        %v389 = vpop.xlane.xlu0 %388
        %390 = vadd.xlane.f32.xlu0 %v365
        %v391 = vpop.xlane.xlu0 %390
        %392 = vadd.xlane.f32.xlu0 %v366
        %v393 = vpop.xlane.xlu0 %392
        %394 = vadd.xlane.f32.xlu0 %v367
        %v395 = vpop.xlane.xlu0 %394
        %396 = vadd.xlane.f32.xlu0 %v368
        %v397 = vpop.xlane.xlu0 %396
        %398 = vadd.xlane.f32.xlu0 %v369
        %v399 = vpop.xlane.xlu0 %398
        %400 = vadd.xlane.f32.xlu0 %v370
        %v401 = vpop.xlane.xlu0 %400
        %402 = vadd.xlane.f32.xlu0 %v371
        %v403 = vpop.xlane.xlu0 %402
        %v404 = vrsqrt.pop %v373
        %v405 = vrsqrt.pop %v375
        %v406 = vrsqrt.pop %v377
        %v407 = vrsqrt.pop %v379
        %v408 = vrsqrt.pop %v381
        %v409 = vrsqrt.pop %v383
        %v410 = vrsqrt.pop %v385
        %v411 = vrsqrt.pop %v387
        %v412 = vrsqrt.pop %v389
        %v413 = vrsqrt.pop %v391
        %v414 = vrsqrt.pop %v393
        %v415 = vrsqrt.pop %v395
        %v416 = vrsqrt.pop %v397
        %v417 = vrsqrt.pop %v399
        %v418 = vrsqrt.pop %v401
        %v419 = vrsqrt.pop %v403
        %v420 = vmin.f32 %v404, 1000000.0
        %v421 = vmin.f32 %v405, 1000000.0
        %v422 = vmin.f32 %v406, 1000000.0
        %v423 = vmin.f32 %v407, 1000000.0
        %v424 = vmin.f32 %v408, 1000000.0
        %v425 = vmin.f32 %v409, 1000000.0
        %v426 = vmin.f32 %v410, 1000000.0
        %v427 = vmin.f32 %v411, 1000000.0
        %v428 = vmin.f32 %v412, 1000000.0
        %v429 = vmin.f32 %v413, 1000000.0
        %v430 = vmin.f32 %v414, 1000000.0
        %v431 = vmin.f32 %v415, 1000000.0
        %v432 = vmin.f32 %v416, 1000000.0
        %v433 = vmin.f32 %v417, 1000000.0
        %v434 = vmin.f32 %v418, 1000000.0
        %v435 = vmin.f32 %v419, 1000000.0
        %v436 = vmul.f32 %v278, %v420
        %v437 = vmul.f32 %v283, %v421
        %v438 = vmul.f32 %v288, %v422
        %v439 = vmul.f32 %v293, %v423
        %v440 = vmul.f32 %v298, %v424
        %v441 = vmul.f32 %v303, %v425
        %v442 = vmul.f32 %v308, %v426
        %v443 = vmul.f32 %v313, %v427
        %v444 = vmul.f32 %v318, %v428
        %v445 = vmul.f32 %v323, %v429
        %v446 = vmul.f32 %v328, %v430
        %v447 = vmul.f32 %v333, %v431
        %v448 = vmul.f32 %v338, %v432
        %v449 = vmul.f32 %v343, %v433
        %v450 = vmul.f32 %v348, %v434
        %v451 = vmul.f32 %v353, %v435
        %452 = vst [vmem:[%s176] sm:$0xff] %v436
        %453 = vst [vmem:[%s176 + $0x8] sm:$0xff] %v437
        %454 = vst [vmem:[%s176 + $0x10] sm:$0xff] %v438
        %455 = vst [vmem:[%s176 + $0x18] sm:$0xff] %v439
        %456 = vst [vmem:[%s176 + $0x20] sm:$0xff] %v440
        %457 = vst [vmem:[%s176 + $0x28] sm:$0xff] %v441
        %458 = vst [vmem:[%s176 + $0x30] sm:$0xff] %v442
        %459 = vst [vmem:[%s176 + $0x38] sm:$0xff] %v443
        %460 = vst [vmem:[%s176 + $0x40] sm:$0xff] %v444
        %461 = vst [vmem:[%s176 + $0x48] sm:$0xff] %v445
        %462 = vst [vmem:[%s176 + $0x50] sm:$0xff] %v446
        %463 = vst [vmem:[%s176 + $0x58] sm:$0xff] %v447
        %464 = vst [vmem:[%s176 + $0x60] sm:$0xff] %v448
        %465 = vst [vmem:[%s176 + $0x68] sm:$0xff] %v449
        %466 = vst [vmem:[%s176 + $0x70] sm:$0xff] %v450
        %467 = vst [vmem:[%s176 + $0x78] sm:$0xff] %v451
        %s468 = sand.u32 %s75, 1
        %s469 = scalar_lea.sflag [#allocation4], %s468
        %s470 = sand.u32 %s75, 1
        %s471 = smul.addr %s470, 128
        %s472 = scalar_lea.vmem [#allocation7], %s471
        // Predicated region
        $region37: #{tpu_custom_call.1} parent=27 // pred_check
          %p473 = pneg %p85
        $region38: #{tpu_custom_call.1} parent=27 // pred_check_branch
          %475 = sbr.rel (%p473) target = $region40
        $region39: #{tpu_custom_call.1} parent=27 // pred_region
          %s476 = smul.u32 16, %s20
          %s478 = ssub.s32 2048, 2048
          %479 = vsyncadd %s469, %s478
          %s480 = smul.addr %s476, 128
          %s481 = scalar_lea.hbm %s2, %s480
          %s482 = sshll.u32 %s472, 4
          %s483 = int_to_ptr.vmem [resolvable:$true] %s482
          %488 = dma.vmem_to_hbm [thread:$0]  %s483, 2048, %s481, %s469, 128, 128, 8
        $region40: #{tpu_custom_call.1} parent=27 // pred_fallthru
          _
      $region28: #{tpu_custom_call.1} parent=5 // pred_fallthru
        _
      %p489 = scmp.le.s32.totalorder 2, %s15
      // Predicated region
      $region41: #{tpu_custom_call.1} parent=5 // pred_check
        %p490 = pneg %p489
      $region42: #{tpu_custom_call.1} parent=5 // pred_check_branch
        %492 = sbr.rel (%p490) target = $region44
      $region43: #{tpu_custom_call.1} parent=5 // pred_region
        %s493 = ssub.s32 %s15, 2
        // Predicated region
        $region45: #{tpu_custom_call.1} parent=43 // pred_check
          %p494 = pneg %p91
        $region46: #{tpu_custom_call.1} parent=43 // pred_check_branch
          %496 = sbr.rel (%p494) target = $region48
        $region47: #{tpu_custom_call.1} parent=43 // pred_region
          %s497 = sand.u32 %s76, 1
          %s498 = scalar_lea.sflag [#allocation4], %s497
          %s499 = sand.u32 %s76, 1
          %s500 = smul.addr %s499, 128
          %s501 = scalar_lea.vmem [#allocation7], %s500
          %502 = dma.done %s498, 2048
        $region48: #{tpu_custom_call.1} parent=43 // pred_fallthru
          _
      $region44: #{tpu_custom_call.1} parent=5 // pred_fallthru
        _
    $region6: #{tpu_custom_call.1} parent=1 // loop_footer
      %s19 = sadd.s32 1, %s15
    $region7: #{tpu_custom_call.1} parent=1 // loop_footer_branch
      %14 = sbr.rel target = $region3
    $region8: #{tpu_custom_call.1} parent=1 // loop_exit
      _
    %503 = vsyncpa [#allocation3], 1
    %s504 = scalar_lea.sflag [#allocation3], 1
    %505 = vsyncpa %s504, 1
    %506 = vsyncpa [#allocation6], 1
    %507 = vsyncpa [#allocation4], 1
    %s508 = scalar_lea.sflag [#allocation4], 1
    %509 = vsyncpa %s508, 1

</llo_original>
